<compile_context>
chip_gen: v6e
topology: v6e:2x2x1
jax: 0.10.0
libtpu: 0.0.40
codegen_flags: <defaults>
</compile_context>

<pallas_src>
import functools
import math

import jax
import jax.numpy as jnp
import numpy as np
from jax.experimental import pallas as pl
from jax.experimental.pallas import tpu as pltpu

N_LAYERS = 8  # 4 encoder + 4 decoder Linear layers


def affine_kernel(x_ref, w_ref, b_ref, o_ref):
    # x_ref : (tb, D)  un-padded activation tile (D = input_dim, last dim = full array dim)
    # w_ref : (D, D)   folded weight, resident across grid steps
    # b_ref : (1, D)   folded bias row (sublane broadcast)
    # o_ref : (tb, D)  output tile
    o_ref[...] = (
        jnp.dot(x_ref[...], w_ref[...], preferred_element_type=jnp.float32)
        + b_ref[...]
    )


def make_params(input_dim, bottleneck_dim, seed=0):
    """Deterministic init mimicking torch.nn.Linear (uniform +-1/sqrt(fan_in))."""
    dims = [input_dim, 4, 8, 5, bottleneck_dim,   # encoder
            6, 10, 8, input_dim]                  # decoder
    key = jax.random.PRNGKey(seed)
    weights, biases = [], []
    for i in range(N_LAYERS):
        fan_in, fan_out = dims[i], dims[i + 1]
        key, kw, kb = jax.random.split(key, 3)
        bound = 1.0 / math.sqrt(fan_in)
        # torch stores W as (out, in); layers compute h @ W.T + b
        W = jax.random.uniform(kw, (fan_out, fan_in), jnp.float32, -bound, bound)
        b = jax.random.uniform(kb, (fan_out,), jnp.float32, -bound, bound)
        weights.append(np.asarray(W))
        biases.append(np.asarray(b))
    return dims, weights, biases


def fold_params(weights, biases):
    """Fold the 8 affine layers (no activation between them) into a single
    affine map y = x @ W_eff + b_eff.  Done ONCE, in float64, cast to f32."""
    W_eff = np.asarray(weights[0], np.float64).T          # (in, out0) so x @ W works
    b_eff = np.asarray(biases[0], np.float64)
    for W, b in zip(weights[1:], biases[1:]):
        Wt = np.asarray(W, np.float64).T
        W_eff = W_eff @ Wt
        b_eff = b_eff @ Wt + np.asarray(b, np.float64)
    return (jnp.asarray(W_eff, jnp.float32),              # (D, D)
            jnp.asarray(b_eff[None, :], jnp.float32))     # (1, D)


def _choose_tiling(batch):
    # Bucket the padded row count to the next power of two (>= 8 sublanes) so
    # variable batch sizes map onto a small set of compiled kernels.
    rows = max(8, 1 << int(math.ceil(math.log2(max(batch, 1)))))
    tb = min(2048, rows)
    # Keep >= 2 grid steps once the batch allows it so v7x's two TensorCores
    # both get work under dimension_semantics=("parallel",).
    if rows >= 16 and tb == rows:
        tb = rows // 2            # power of two >= 8, still a sublane multiple
    return rows, tb


@functools.partial(jax.jit, static_argnames=("rows", "tb"))
def _forward(x, w, b, *, rows, tb):
    batch, d = x.shape
    # Row padding and the final row slice live inside the same jit as the
    # pallas_call: one executable, no extra dispatches / HBM round-trips.
    x_pad = jnp.zeros((rows, d), jnp.float32).at[:batch].set(x)
    out_pad = pl.pallas_call(
        affine_kernel,
        out_shape=jax.ShapeDtypeStruct((rows, d), jnp.float32),
        grid_spec=pltpu.PrefetchScalarGridSpec(
            num_scalar_prefetch=0,
            grid=(rows // tb,),
            in_specs=[
                pl.BlockSpec((tb, d), lambda i: (i, 0)),   # batch-tiled x, no lane pad
                pl.BlockSpec((d, d), lambda i: (0, 0)),    # resident folded weight
                pl.BlockSpec((1, d), lambda i: (0, 0)),    # resident folded bias
            ],
            out_specs=pl.BlockSpec((tb, d), lambda i: (i, 0)),
        ),
        compiler_params=pltpu.CompilerParams(
            dimension_semantics=("parallel",),
        ),
    )(x_pad, w, b)
    # Padded rows carry broadcast bias values, not zeros — slice them off here.
    return out_pad[:batch]


def simple_autoencoder_pallas(x, w_eff, b_eff):
    """x: (batch, input_dim) f32.  w_eff/b_eff come from fold_params (one-time)."""
    rows, tb = _choose_tiling(x.shape[0])
    return _forward(x, w_eff, b_eff, rows=rows, tb=tb)


def reference_forward(x, weights, biases):
    # Sequential (un-folded) reference in float64.
    h = np.asarray(x, dtype=np.float64)
    for W, b in zip(weights, biases):
        h = h @ np.asarray(W, np.float64).T + np.asarray(b, np.float64)
    return h


if __name__ == "__main__":
    input_dim = 16
    bottleneck_dim = 3
    batch = 2

    dims, weights, biases = make_params(input_dim, bottleneck_dim, seed=0)

    # One-time parameter folding (float64) + cast, hoisted out of the call path.
    w_eff, b_eff = fold_params(weights, biases)

    key = jax.random.PRNGKey(0)
    x = jax.random.normal(key, (batch, input_dim), jnp.float32)

    out = simple_autoencoder_pallas(x, w_eff, b_eff)
    out = jax.block_until_ready(out)

    ref = reference_forward(np.asarray(x), weights, biases)
    np.testing.assert_allclose(np.asarray(out), ref, rtol=1e-4, atol=1e-5)

    print("KERNEL_OK")
</pallas_src>

<mosaic_0001>
module attributes {stable_mosaic.version = 11 : i64} {
  func.func @affine_kernel(%arg0: i32, %arg1: memref<8x16xf32, #tpu.memory_space<vmem>>, %arg2: memref<16x16xf32, #tpu.memory_space<vmem>>, %arg3: memref<1x16xf32, #tpu.memory_space<vmem>>, %arg4: memref<8x16xf32, #tpu.memory_space<vmem>>) attributes {dimension_semantics = [#tpu.dimension_semantics<parallel>], iteration_bounds = array<i64: 1>, scalar_prefetch = 0 : i64, scratch_operands = 0 : i64, tpu.core_type = #tpu.core_type<tc>, window_params = [{transform_indices = @transform_0, window_bounds = array<i64: 8, 16>}, {pipeline_mode = #tpu.pipeline_mode<synchronous>, transform_indices = @transform_1, window_bounds = array<i64: 16, 16>}, {pipeline_mode = #tpu.pipeline_mode<synchronous>, transform_indices = @transform_2, window_bounds = array<i64: 1, 16>}, {transform_indices = @transform_3, window_bounds = array<i64: 8, 16>}]} {
    %c0 = arith.constant 0 : index
    %c0_0 = arith.constant 0 : index
    %0 = vector.load %arg1[%c0, %c0_0] : memref<8x16xf32, #tpu.memory_space<vmem>>, vector<8x16xf32>
    %c0_1 = arith.constant 0 : index
    %c0_2 = arith.constant 0 : index
    %1 = vector.load %arg2[%c0_1, %c0_2] : memref<16x16xf32, #tpu.memory_space<vmem>>, vector<16x16xf32>
    %cst = arith.constant dense<0.000000e+00> : vector<8x16xf32>
    %2 = tpu.matmul %0, %1, %cst {dimension_numbers = #tpu.dot_dimension_numbers<[1], [0], [0], [1], [0, 0, 1, 1], [], []>} : vector<8x16xf32>, vector<16x16xf32>, vector<8x16xf32> -> vector<8x16xf32>
    %c0_3 = arith.constant 0 : index
    %c0_4 = arith.constant 0 : index
    %3 = vector.load %arg3[%c0_3, %c0_4] : memref<1x16xf32, #tpu.memory_space<vmem>>, vector<1x16xf32>
    %4 = vector.broadcast %3 : vector<1x16xf32> to vector<8x16xf32>
    %5 = arith.addf %2, %4 : vector<8x16xf32>
    %c0_5 = arith.constant 0 : index
    %c0_6 = arith.constant 0 : index
    %6 = vector.load %arg4[%c0_5, %c0_6] : memref<8x16xf32, #tpu.memory_space<vmem>>, vector<8x16xf32>
    tpu.vector_store %arg4[%c0_5, %c0_6], %5 {strides = array<i32>} : memref<8x16xf32, #tpu.memory_space<vmem>>, vector<8x16xf32>,
    return
  }
  func.func @transform_0(%arg0: i32) -> (i32, i32) {
    %c0_i32 = arith.constant 0 : i32
    %c0_i32_0 = arith.constant 0 : i32
    return %arg0, %c0_i32 : i32, i32
  }
  func.func @transform_1(%arg0: i32) -> (i32, i32) {
    %c0_i32 = arith.constant 0 : i32
    %c0_i32_0 = arith.constant 0 : i32
    %c0_i32_1 = arith.constant 0 : i32
    return %c0_i32, %c0_i32_0 : i32, i32
  }
  func.func @transform_2(%arg0: i32) -> (i32, i32) {
    %c0_i32 = arith.constant 0 : i32
    %c0_i32_0 = arith.constant 0 : i32
    %c0_i32_1 = arith.constant 0 : i32
    return %c0_i32, %c0_i32_0 : i32, i32
  }
  func.func @transform_3(%arg0: i32) -> (i32, i32) {
    %c0_i32 = arith.constant 0 : i32
    %c0_i32_0 = arith.constant 0 : i32
    return %arg0, %c0_i32 : i32, i32
  }
}

</mosaic_0001>

<llo_original>
// kernel: _forward.1
$region0: #{_forward.1}
  #allocation0 [shape = 'u32[]', space=smem, size = 0x4, offset = 0x4, fixed_abs, tag = 'smem constant byte address 0x4 - core index']
  #allocation1 [shape = 'u32[144,128]{1,0:T(1,128)}', space=vmem, size = 0x12000, scoped, tag = 'internal scratch']
  %s0 = inlined_call_operand.vmem [shape: f32[8,16], index: 0, kind: input, shape index: {}]
  %s1 = inlined_call_operand.hbm [shape: f32[16,16], index: 1, kind: input, shape index: {}]
  %s2 = inlined_call_operand.vmem [shape: f32[1,16], index: 2, kind: input, shape index: {}]
  %s3 = inlined_call_operand.vmem [shape: f32[8,16], index: 3, kind: output, shape index: {}]
  %s4 = sld [smem:[#allocation0]]
  $region26: #{_forward.1} parent=0
    _
  %s6 = ssub.s32 1, %s4
  %s7 = scalar_select 0, %s6, %s4
  $region1: #{_forward.1} parent=0
    #allocation2 [shape = 'u8[8192]{0}', space=vmem, size = 0x2000, scoped, tag = 'input window, operand 1, single buffered']
    #allocation3 [shape = 's32[1]{0}', space=sflag, size = 0x4, scoped, tag = 'scoped memory for _forward.1']
    %8 = vsyncpa [#allocation3], 0
    // Predicated region
    $region2: #{_forward.1} parent=1 // pred_check
      _
    $region3: #{_forward.1} parent=1 // pred_check_branch
      %10 = sbr.rel (0) target = $region5
    $region4: #{_forward.1} parent=1 // pred_region
      _
    $region5: #{_forward.1} parent=1 // pred_fallthru
      _
    // Predicated region
    $region6: #{_forward.1} parent=1 // pred_check
      _
    $region7: #{_forward.1} parent=1 // pred_check_branch
      %12 = sbr.rel (0) target = $region9
    $region8: #{_forward.1} parent=1 // pred_region
      %s14 = ssub.s32 256, 256
      %15 = vsyncadd [#allocation3], %s14
      %s16 = sshll.u32 [#allocation2], 4
      %s17 = int_to_ptr.vmem [resolvable:$true] %s16
      %22 = dma.hbm_to_vmem [thread:$0]  %s1, 256, %s17, [#allocation3], 128, 128, 8
    $region9: #{_forward.1} parent=1 // pred_fallthru
      _
    // Predicated region
    $region10: #{_forward.1} parent=1 // pred_check
      _
    $region11: #{_forward.1} parent=1 // pred_check_branch
      %24 = sbr.rel (0) target = $region13
    $region12: #{_forward.1} parent=1 // pred_region
      _
    $region13: #{_forward.1} parent=1 // pred_fallthru
      _
    // Predicated region
    $region14: #{_forward.1} parent=1 // pred_check
      _
    $region15: #{_forward.1} parent=1 // pred_check_branch
      %26 = sbr.rel (0) target = $region17
    $region16: #{_forward.1} parent=1 // pred_region
      %27 = dma.done [#allocation3], 256
    $region17: #{_forward.1} parent=1 // pred_fallthru
      _
    %v28 = vld [vmem:[%s0] sm:$0xff]
    %v29 = vld [vmem:[#allocation2] sm:$0xff]
    %v30 = vld [vmem:[#allocation2 + $0x8] sm:$0xff]
    %v31 = vld [vmem:[%s2] sm:$0x1]
    %v33 = vlaneseq
    %v34 = vshrl.u32 %v33, 7
    %v35 = vsub.s32 0, %v34
    %v36 = vrot.slane %v31, %v35
    %vm38 = vcmask 130048
    %v40 = vsel %vm38, %v28, 0
    %42 = vmatprep.subr.mxu0 0.0
    %43 = vmatpush1.msra.mxu0 0.0
    %44 = vmatprep.subr.mxu0 0.0
    %45 = vmatpush1.msra.mxu0 0.0
    %46 = vmatprep.subr.mxu0 0.0
    %47 = vmatpush1.msra.mxu0 0.0
    %48 = vmatprep.subr.mxu0 0.0
    %49 = vmatpush1.msra.mxu0 0.0
    %50 = vmatprep.subr.mxu0 0.0
    %51 = vmatpush1.msra.mxu0 0.0
    %52 = vmatprep.subr.mxu0 0.0
    %53 = vmatpush1.msra.mxu0 0.0
    %54 = vmatprep.subr.mxu0 0.0
    %55 = vmatpush1.msra.mxu0 0.0
    %56 = vmatprep.subr.mxu0 0.0
    %57 = vmatpush1.msra.mxu0 0.0
    %58 = vmatprep.subr.mxu0 0.0
    %59 = vmatpush1.msra.mxu0 0.0
    %60 = vmatprep.subr.mxu0 0.0
    %61 = vmatpush1.msra.mxu0 0.0
    %62 = vmatprep.subr.mxu0 0.0
    %63 = vmatpush1.msra.mxu0 0.0
    %64 = vmatprep.subr.mxu0 0.0
    %65 = vmatpush1.msra.mxu0 0.0
    %66 = vmatprep.subr.mxu0 0.0
    %67 = vmatpush1.msra.mxu0 0.0
    %68 = vmatprep.subr.mxu0 0.0
    %69 = vmatpush1.msra.mxu0 0.0
    %70 = vmatprep.subr.mxu0 0.0
    %71 = vmatpush1.msra.mxu0 %v30
    %72 = vmatprep.subr.mxu0 0.0
    %73 = vmatpush1.msra.mxu0 %v29
    %74 = vmatprep.subr.mxu0 0.0
    %75 = vmatpush2.msra.mxu0 0.0
    %76 = vmatprep.subr.mxu0 0.0
    %77 = vmatpush2.msra.mxu0 0.0
    %78 = vmatprep.subr.mxu0 0.0
    %79 = vmatpush2.msra.mxu0 0.0
    %80 = vmatprep.subr.mxu0 0.0
    %81 = vmatpush2.msra.mxu0 0.0
    %82 = vmatprep.subr.mxu0 0.0
    %83 = vmatpush2.msra.mxu0 0.0
    %84 = vmatprep.subr.mxu0 0.0
    %85 = vmatpush2.msra.mxu0 0.0
    %86 = vmatprep.subr.mxu0 0.0
    %87 = vmatpush2.msra.mxu0 0.0
    %88 = vmatprep.subr.mxu0 0.0
    %89 = vmatpush2.msra.mxu0 0.0
    %90 = vmatprep.subr.mxu0 0.0
    %91 = vmatpush2.msra.mxu0 0.0
    %92 = vmatprep.subr.mxu0 0.0
    %93 = vmatpush2.msra.mxu0 0.0
    %94 = vmatprep.subr.mxu0 0.0
    %95 = vmatpush2.msra.mxu0 0.0
    %96 = vmatprep.subr.mxu0 0.0
    %97 = vmatpush2.msra.mxu0 0.0
    %98 = vmatprep.subr.mxu0 0.0
    %99 = vmatpush2.msra.mxu0 0.0
    %100 = vmatprep.subr.mxu0 0.0
    %101 = vmatpush2.msra.mxu0 0.0
    %102 = vmatprep.subr.mxu0 0.0
    %103 = vmatpush2.msra.mxu0 0.0
    %104 = vmatprep.subr.mxu0 0.0
    %105 = vmatpush2.msra.mxu0 0.0
    %106 = vmatprep.mubr.f32.mxu0 0.0
    %107 = vmatmul.mubr.f32.gmra.mxu0 %v40
    %v108 = vpop.f32.mrf.mxu0
    %v109 = vadd.f32 %v36, %v108
    %v110 = vpop.f32.mrf.mxu0
    %111 = vdwg.mxu0
    %112 = vst.msk [vmem:[%s3] sm:$0xff] %vm38, %v109
    // Predicated region
    $region18: #{_forward.1} parent=1 // pred_check
      _
    $region19: #{_forward.1} parent=1 // pred_check_branch
      %114 = sbr.rel (0) target = $region21
    $region20: #{_forward.1} parent=1 // pred_region
      _
    $region21: #{_forward.1} parent=1 // pred_fallthru
      _
    // Predicated region
    $region22: #{_forward.1} parent=1 // pred_check
      _
    $region23: #{_forward.1} parent=1 // pred_check_branch
      %116 = sbr.rel (0) target = $region25
    $region24: #{_forward.1} parent=1 // pred_region
      _
    $region25: #{_forward.1} parent=1 // pred_fallthru
      _
    %117 = vsyncpa [#allocation3], 1

</llo_original>
